<compile_context>
chip_gen: v5e
topology: v5e:2x2
jax: 0.10.0
libtpu: 0.0.40
codegen_flags: <defaults>
</compile_context>

<pallas_src>
import functools

import jax
import jax.numpy as jnp
from jax.experimental import pallas as pl
from jax.experimental.pallas import tpu as pltpu


def _round_up(x: int, m: int) -> int:
    return (x + m - 1) // m * m


def _pick_batch_tile(b: int, block_b: int) -> int:
    """Batch tile: multiple of 8 (or == B for tiny B); >= 2 (even) grid steps
    whenever possible so both v7x TensorCores get work."""
    if b <= 8:
        return b                      # full-dim block satisfies the tiling rule
    nb = max(2, pl.cdiv(b, block_b))  # at least 2 steps
    if nb % 2:
        nb += 1                       # even step count -> balanced across 2 TCs
    tm = _round_up(pl.cdiv(b, nb), 8)
    return max(8, min(tm, _round_up(b, 8)))


def _graphlet_counting_kernel(x_ref, w_ref, b_ref, o_ref):
    """x_ref: [TM, G] native dtype, w_ref: [G, O] bf16/f32,
    b_ref: [1, O] f32, o_ref: [TM, O]."""
    eps = jnp.float32(1e-4)
    x = x_ref[...].astype(jnp.float32)

    # Per-row denominator (tiny [TM, 1] VPU reduction, f32).
    denom = jnp.sum(x, axis=-1, keepdims=True) + eps
    inv = pl.reciprocal(denom, approx=True)          # EUP slot, ~free

    # Normalize first (PyTorch order; keeps bf16 rounding on O(1) values),
    # then feed the MXU bf16 x bf16 with f32 accumulation (native mode).
    xn = (x * inv).astype(jnp.bfloat16)
    acc = jnp.dot(xn, w_ref[...].astype(jnp.bfloat16),
                  preferred_element_type=jnp.float32)

    o_ref[...] = (acc + b_ref[...].astype(jnp.float32)).astype(o_ref.dtype)


@functools.partial(jax.jit, static_argnames=("block_b", "out_dtype"))
def graphlet_counting_forward(graph_has_graphlet, weight_sel, bias, *,
                              block_b: int = 2048,
                              out_dtype=jnp.float32):
    """graph_has_graphlet: [B, G] (any numeric dtype, streamed as-is),
    weight_sel: [G, O], bias: [O]."""
    x = graph_has_graphlet            # no wrapper cast: keep native dtype
    B, G = x.shape
    G2, O = weight_sel.shape
    assert G == G2, (G, G2)

    tm = _pick_batch_tile(B, block_b)
    nb = pl.cdiv(B, tm)               # ragged last tile handled by Pallas masking
    bias2d = bias.reshape(1, O).astype(jnp.float32)

    out_itemsize = jnp.dtype(out_dtype).itemsize
    x_itemsize = jnp.dtype(x.dtype).itemsize
    w_itemsize = jnp.dtype(weight_sel.dtype).itemsize

    # Explicit VMEM budget (double-buffered x/out tiles + resident weight/bias).
    vmem_needed = (2 * tm * G * x_itemsize
                   + 2 * tm * O * out_itemsize
                   + 2 * G * O * w_itemsize
                   + 2 * O * 4)
    vmem_limit = None
    if vmem_needed > 32 * 1024 * 1024:
        # Stay under v7x's 64 MiB physical VMEM; shrink block_b if this trips.
        vmem_limit = int(min(vmem_needed + vmem_needed // 4, 64 * 1024 * 1024))

    cost = pl.CostEstimate(
        flops=2 * B * G * O,
        transcendentals=B,            # one reciprocal per row
        bytes_accessed=(B * G * x_itemsize + G * O * w_itemsize
                        + O * 4 + B * O * out_itemsize),
    )

    out = pl.pallas_call(
        _graphlet_counting_kernel,
        out_shape=jax.ShapeDtypeStruct((B, O), out_dtype),
        grid_spec=pltpu.PrefetchScalarGridSpec(
            num_scalar_prefetch=0,
            grid=(nb,),
            in_specs=[
                pl.BlockSpec((tm, G), lambda i: (i, 0)),   # batch tile
                pl.BlockSpec((G, O), lambda i: (0, 0)),    # resident weight
                pl.BlockSpec((1, O), lambda i: (0, 0)),    # resident bias
            ],
            out_specs=pl.BlockSpec((tm, O), lambda i: (i, 0)),
        ),
        compiler_params=pltpu.CompilerParams(
            dimension_semantics=("parallel",),
            vmem_limit_bytes=vmem_limit),
        cost_estimate=cost,
    )(x, weight_sel, bias2d)

    return out


class GraphletCountingJAX:
    """JAX/Pallas port of the PyTorch GraphletCounting module."""

    def __init__(self, o_dim: int, order_dict: dict, key,
                 stream_dtype=jnp.bfloat16):
        self.order_dict = order_dict
        self.out_dim = o_dim
        # dtype used to stream the gathered weight rows through HBM->VMEM
        # (master weights stay f32, like the PyTorch Parameter).
        self.stream_dtype = stream_dtype
        n = len(order_dict)

        k_w, k_b = jax.random.split(key)
        # kaiming_uniform_(a=sqrt(5), mode='fan_out'):
        #   fan_out = weight.size(0) = n ; gain = sqrt(2/(1+a^2)) = sqrt(1/3)
        #   bound = gain * sqrt(3 / fan)
        gain = (2.0 / (1.0 + 5.0)) ** 0.5
        w_bound = gain * (3.0 / n) ** 0.5
        self.weight = jax.random.uniform(
            k_w, (n, o_dim), jnp.float32, minval=-w_bound, maxval=w_bound)
        # bias ~ U(-1/sqrt(n), 1/sqrt(n))
        b_bound = 1.0 / (n ** 0.5)
        self.bias = jax.random.uniform(
            k_b, (o_dim,), jnp.float32, minval=-b_bound, maxval=b_bound)

    def forward(self, graph_has_graphlet, graphlet_ids):
        # Glue: dict lookup + row gather stays in plain JAX.
        idx = jnp.array([self.order_dict[k] for k in graphlet_ids],
                        dtype=jnp.int32)
        weight_sel = self.weight[idx].astype(self.stream_dtype)  # [G, O]
        return graphlet_counting_forward(graph_has_graphlet, weight_sel,
                                         self.bias)


if __name__ == "__main__":
    key = jax.random.PRNGKey(0)
    k_model, k_counts = jax.random.split(key)

    # Small, forward-consistent shapes:
    B = 8          # graphs in the batch
    G = 16         # graphlets present in this batch
    N_TYPES = 24   # total graphlet vocabulary (len(order_dict))
    O_DIM = 32     # output embedding dim

    # order_dict maps graphlet string ids -> rows of `weight`.
    order_dict = {f"g{i}": i for i in range(N_TYPES)}
    # graphlet ids observed in this batch (subset / permutation of vocabulary).
    graphlet_ids = [f"g{(3 * j + 1) % N_TYPES}" for j in range(G)]

    model = GraphletCountingJAX(O_DIM, order_dict, k_model)

    # batch.graph_has_graphlet: non-negative graphlet counts, [B, G].
    graph_has_graphlet = jax.random.uniform(
        k_counts, (B, G), jnp.float32, minval=0.0, maxval=10.0)

    out = model.forward(graph_has_graphlet, graphlet_ids)
    out = jax.block_until_ready(out)

    # Reference mirrors the kernel's quantization (bf16 streamed weights,
    # bf16 normalized counts fed to the MXU); tolerance covers the kernel's
    # approximate EUP reciprocal vs. the exact divide used here.
    idx = jnp.array([order_dict[k] for k in graphlet_ids], dtype=jnp.int32)
    w_bf = model.weight[idx].astype(jnp.bfloat16).astype(jnp.float32)
    xs = graph_has_graphlet.astype(jnp.float32)
    xn = xs / (xs.sum(axis=-1, keepdims=True) + 1e-4)
    xn_bf = xn.astype(jnp.bfloat16).astype(jnp.float32)
    ref = xn_bf @ w_bf + model.bias

    assert out.shape == (B, O_DIM)
    max_err = float(jnp.max(jnp.abs(out - ref)))
    assert jnp.allclose(out, ref, atol=5e-3, rtol=5e-3), f"max_err={max_err}"

    print("KERNEL_OK")
</pallas_src>

<mosaic_0001>
module attributes {stable_mosaic.version = 11 : i64} {
  func.func @_graphlet_counting_kernel(%arg0: i32, %arg1: memref<8x16xf32, #tpu.memory_space<vmem>>, %arg2: memref<16x32xbf16, #tpu.memory_space<vmem>>, %arg3: memref<1x32xf32, #tpu.memory_space<vmem>>, %arg4: memref<8x32xf32, #tpu.memory_space<vmem>>) attributes {dimension_semantics = [#tpu.dimension_semantics<parallel>], iteration_bounds = array<i64: 1>, scalar_prefetch = 0 : i64, scratch_operands = 0 : i64, tpu.core_type = #tpu.core_type<tc>, window_params = [{transform_indices = @transform_0, window_bounds = array<i64: 8, 16>}, {pipeline_mode = #tpu.pipeline_mode<synchronous>, transform_indices = @transform_1, window_bounds = array<i64: 16, 32>}, {pipeline_mode = #tpu.pipeline_mode<synchronous>, transform_indices = @transform_2, window_bounds = array<i64: 1, 32>}, {transform_indices = @transform_3, window_bounds = array<i64: 8, 32>}]} {
    %c0 = arith.constant 0 : index
    %c0_0 = arith.constant 0 : index
    %0 = vector.load %arg1[%c0, %c0_0] : memref<8x16xf32, #tpu.memory_space<vmem>>, vector<8x16xf32>
    %cst = arith.constant dense<0.000000e+00> : vector<8xf32>
    %1 = vector.multi_reduction <add>, %0, %cst [1] : vector<8x16xf32> to vector<8xf32>
    %2 = vector.shape_cast %1 : vector<8xf32> to vector<8x1xf32>
    %cst_1 = arith.constant 9.99999974E-5 : f32
    %3 = vector.broadcast %cst_1 : f32 to vector<8x1xf32>
    %4 = arith.addf %2, %3 : vector<8x1xf32>
    %5 = tpu.reciprocal %4 {approx = true} : vector<8x1xf32> -> vector<8x1xf32>
    %6 = vector.broadcast %5 : vector<8x1xf32> to vector<8x16xf32>
    %7 = arith.mulf %0, %6 : vector<8x16xf32>
    %8 = arith.truncf %7 : vector<8x16xf32> to vector<8x16xbf16>
    %c0_2 = arith.constant 0 : index
    %c0_3 = arith.constant 0 : index
    %9 = vector.load %arg2[%c0_2, %c0_3] : memref<16x32xbf16, #tpu.memory_space<vmem>>, vector<16x32xbf16>
    %cst_4 = arith.constant dense<0.000000e+00> : vector<8x32xf32>
    %10 = tpu.matmul %8, %9, %cst_4 {dimension_numbers = #tpu.dot_dimension_numbers<[1], [0], [0], [1], [0, 0, 1, 1], [], []>} : vector<8x16xbf16>, vector<16x32xbf16>, vector<8x32xf32> -> vector<8x32xf32>
    %c0_5 = arith.constant 0 : index
    %c0_6 = arith.constant 0 : index
    %11 = vector.load %arg3[%c0_5, %c0_6] : memref<1x32xf32, #tpu.memory_space<vmem>>, vector<1x32xf32>
    %12 = vector.broadcast %11 : vector<1x32xf32> to vector<8x32xf32>
    %13 = arith.addf %10, %12 : vector<8x32xf32>
    %c0_7 = arith.constant 0 : index
    %c0_8 = arith.constant 0 : index
    %14 = vector.load %arg4[%c0_7, %c0_8] : memref<8x32xf32, #tpu.memory_space<vmem>>, vector<8x32xf32>
    tpu.vector_store %arg4[%c0_7, %c0_8], %13 {strides = array<i32>} : memref<8x32xf32, #tpu.memory_space<vmem>>, vector<8x32xf32>,
    return
  }
  func.func @transform_0(%arg0: i32) -> (i32, i32) {
    %c0_i32 = arith.constant 0 : i32
    %c0_i32_0 = arith.constant 0 : i32
    return %arg0, %c0_i32 : i32, i32
  }
  func.func @transform_1(%arg0: i32) -> (i32, i32) {
    %c0_i32 = arith.constant 0 : i32
    %c0_i32_0 = arith.constant 0 : i32
    %c0_i32_1 = arith.constant 0 : i32
    return %c0_i32, %c0_i32_0 : i32, i32
  }
  func.func @transform_2(%arg0: i32) -> (i32, i32) {
    %c0_i32 = arith.constant 0 : i32
    %c0_i32_0 = arith.constant 0 : i32
    %c0_i32_1 = arith.constant 0 : i32
    return %c0_i32, %c0_i32_0 : i32, i32
  }
  func.func @transform_3(%arg0: i32) -> (i32, i32) {
    %c0_i32 = arith.constant 0 : i32
    %c0_i32_0 = arith.constant 0 : i32
    return %arg0, %c0_i32 : i32, i32
  }
}

</mosaic_0001>

<llo_original>
// kernel: graphlet_counting_forward.1
$region0: #{graphlet_counting_forward.1}
  #allocation0 [shape = 'u32[]', space=smem, size = 0x4, offset = 0x4, fixed_abs, tag = 'smem constant byte address 0x4 - core index']
  #allocation1 [shape = 'u32[72,128]{1,0:T(1,128)}', space=vmem, size = 0x9000, scoped, tag = 'internal scratch']
  %s0 = inlined_call_operand.hbm [shape: f32[8,16], index: 0, kind: input, shape index: {}]
  %s1 = inlined_call_operand.hbm [shape: bf16[16,32], index: 1, kind: input, shape index: {}]
  %s2 = inlined_call_operand.vmem [shape: f32[1,32], index: 2, kind: input, shape index: {}]
  %s3 = inlined_call_operand.hbm [shape: f32[8,32], index: 3, kind: output, shape index: {}]
  %s4 = sld [smem:[#allocation0]]
  $region30: #{graphlet_counting_forward.1} parent=0
    _
  %s6 = ssub.s32 1, %s4
  %s7 = scalar_select 0, %s6, %s4
  $region1: #{graphlet_counting_forward.1} parent=0
    #allocation2 [shape = 'u8[4096]{0}', space=vmem, size = 0x1000, scoped, tag = 'input window, operand 0, single buffered']
    #allocation3 [shape = 's32[1]{0}', space=sflag, size = 0x4, scoped, tag = 'scoped memory for graphlet_counting_forward.1']
    #allocation4 [shape = 's32[1]{0}', space=sflag, size = 0x4, scoped, tag = 'scoped memory for graphlet_counting_forward.1']
    #allocation5 [shape = 'u8[4096]{0}', space=vmem, size = 0x1000, scoped, tag = 'input window, operand 1, single buffered']
    #allocation6 [shape = 's32[1]{0}', space=sflag, size = 0x4, scoped, tag = 'scoped memory for graphlet_counting_forward.1']
    #allocation7 [shape = 'u8[4096]{0}', space=vmem, size = 0x1000, scoped, tag = 'output window, operand 0, single buffered']
    %8 = vsyncpa [#allocation3], 0
    %9 = vsyncpa [#allocation6], 0
    %10 = vsyncpa [#allocation4], 0
    // Predicated region
    $region2: #{graphlet_counting_forward.1} parent=1 // pred_check
      _
    $region3: #{graphlet_counting_forward.1} parent=1 // pred_check_branch
      %12 = sbr.rel (0) target = $region5
    $region4: #{graphlet_counting_forward.1} parent=1 // pred_region
      %14 = vsyncadd [#allocation3], 0
      %s16 = sshll.u32 %s0, 4
      %s17 = int_to_ptr.hbm [resolvable:$true] %s16
      %s18 = sshll.u32 [#allocation2], 4
      %s19 = int_to_ptr.vmem [resolvable:$true] %s18
      %21 = dma.hbm_to_vmem [thread:$0]  %s17, 128, %s19, [#allocation3]
    $region5: #{graphlet_counting_forward.1} parent=1 // pred_fallthru
      _
    // Predicated region
    $region6: #{graphlet_counting_forward.1} parent=1 // pred_check
      _
    $region7: #{graphlet_counting_forward.1} parent=1 // pred_check_branch
      %23 = sbr.rel (0) target = $region9
    $region8: #{graphlet_counting_forward.1} parent=1 // pred_region
      %25 = vsyncadd [#allocation6], 0
      %s26 = sshll.u32 %s1, 4
      %s27 = int_to_ptr.hbm [resolvable:$true] %s26
      %s28 = sshll.u32 [#allocation5], 4
      %s29 = int_to_ptr.vmem [resolvable:$true] %s28
      %34 = dma.hbm_to_vmem [thread:$0]  %s27, 128, %s29, [#allocation6], 64, 64, 4
    $region9: #{graphlet_counting_forward.1} parent=1 // pred_fallthru
      _
    // Predicated region
    $region10: #{graphlet_counting_forward.1} parent=1 // pred_check
      _
    $region11: #{graphlet_counting_forward.1} parent=1 // pred_check_branch
      %36 = sbr.rel (0) target = $region13
    $region12: #{graphlet_counting_forward.1} parent=1 // pred_region
      _
    $region13: #{graphlet_counting_forward.1} parent=1 // pred_fallthru
      _
    // Predicated region
    $region14: #{graphlet_counting_forward.1} parent=1 // pred_check
      _
    $region15: #{graphlet_counting_forward.1} parent=1 // pred_check_branch
      %38 = sbr.rel (0) target = $region17
    $region16: #{graphlet_counting_forward.1} parent=1 // pred_region
      %40 = dma.done [#allocation3], 128
    $region17: #{graphlet_counting_forward.1} parent=1 // pred_fallthru
      _
    // Predicated region
    $region18: #{graphlet_counting_forward.1} parent=1 // pred_check
      _
    $region19: #{graphlet_counting_forward.1} parent=1 // pred_check_branch
      %42 = sbr.rel (0) target = $region21
    $region20: #{graphlet_counting_forward.1} parent=1 // pred_region
      %44 = dma.done [#allocation6], 128
    $region21: #{graphlet_counting_forward.1} parent=1 // pred_fallthru
      _
    %v46 = vld [vmem:[#allocation2] sm:$0xff]
    %vm47 = vcmask 130048
    %v48 = vsel %vm47, %v46, 0.0
    %49 = vadd.xlane.f32.xlu0 %v48
    %v50 = vpop.xlane.xlu0 %49
    %v51 = vadd.f32 %v50, 0.0001
    %v52 = vrcp.pop %v51
    %v53 = vmul.f32 %v46, %v52
    %v54 = vpack.c.bf16 %v53, %v53
    %v55 = vld [vmem:[#allocation5] sm:$0xf]
    %v56 = vld [vmem:[#allocation5 + $0x4] sm:$0xf]
    %v57 = vld [vmem:[%s2] sm:$0x1]
    %v59 = vperm.slane %v57, 0
    %v63 = vunpack.c.l.b16 %v55
    %v64 = vunpack.c.l.b16 %v56
    %v65 = vpack.c.b16 %v64, %v63
    %v68 = vsel %vm47, %v54, 0
    %70 = vmatpush.bf16.msra.mxu0 0
    %71 = vmatpush.bf16.msra.mxu0 0
    %72 = vmatpush.bf16.msra.mxu0 0
    %73 = vmatpush.bf16.msra.mxu0 0
    %74 = vmatpush.bf16.msra.mxu0 0
    %75 = vmatpush.bf16.msra.mxu0 0
    %76 = vmatpush.bf16.msra.mxu0 0
    %77 = vmatpush.bf16.msra.mxu0 %v65
    %78 = vmatmul.bf16.gmra.mxu0 %v68
    %v79 = vpop.f32.mrf.mxu0
    %v80 = vadd.f32 %v59, %v79
    %v81 = vpop.f32.mrf.mxu0
    %82 = vdwg.mxu0
    %vm83 = vcmask 261120
    %84 = vst.msk [vmem:[#allocation7] sm:$0xff] %vm83, %v80
    // Predicated region
    $region22: #{graphlet_counting_forward.1} parent=1 // pred_check
      _
    $region23: #{graphlet_counting_forward.1} parent=1 // pred_check_branch
      %86 = sbr.rel (0) target = $region25
    $region24: #{graphlet_counting_forward.1} parent=1 // pred_region
      %88 = vsyncadd [#allocation4], 0
      %s90 = sshll.u32 [#allocation7], 4
      %s91 = int_to_ptr.vmem [resolvable:$true] %s90
      %s92 = sshll.u32 %s3, 4
      %s93 = int_to_ptr.hbm [resolvable:$true] %s92
      %95 = dma.vmem_to_hbm [thread:$0]  %s91, 128, %s93, [#allocation4]
    $region25: #{graphlet_counting_forward.1} parent=1 // pred_fallthru
      _
    // Predicated region
    $region26: #{graphlet_counting_forward.1} parent=1 // pred_check
      _
    $region27: #{graphlet_counting_forward.1} parent=1 // pred_check_branch
      %97 = sbr.rel (0) target = $region29
    $region28: #{graphlet_counting_forward.1} parent=1 // pred_region
      %99 = dma.done [#allocation4], 128
    $region29: #{graphlet_counting_forward.1} parent=1 // pred_fallthru
      _
    %100 = vsyncpa [#allocation3], 1
    %101 = vsyncpa [#allocation6], 1
    %102 = vsyncpa [#allocation4], 1

</llo_original>
